<compile_context>
chip_gen: v5e
topology: v5e:2x2
jax: 0.10.0
libtpu: 0.0.40
codegen_flags: <defaults>
</compile_context>

<pallas_src>
import functools
import math

import jax
import jax.numpy as jnp
from jax.experimental import pallas as pl
from jax.experimental.pallas import tpu as pltpu

_LANE = 128
_SUBLANE = 8


def _make_pe(max_len: int, d_model: int) -> jnp.ndarray:
    """Deterministic sinusoidal positional-encoding buffer (param setup, pure JAX)."""
    position = jnp.arange(0, max_len, dtype=jnp.float32)[:, None]          # (L, 1)
    div_term = jnp.exp(jnp.arange(0, d_model, 2, dtype=jnp.float32)
                       * -(math.log(10000.0) / d_model))                   # (D/2,)
    pe = jnp.zeros((max_len, d_model), dtype=jnp.float32)
    pe = pe.at[:, 0::2].set(jnp.sin(position * div_term))
    pe = pe.at[:, 1::2].set(jnp.cos(position * div_term))
    return pe                                                               # (L, D)


def _pe_kernel(seed_ref, x_ref, pe_ref, o_ref, *,
               p: float, training: bool, sd: int, tb: int, tn: int,
               thresh: int, inv_keep: float):
    # Hot path: broadcast add (no dtype promotion: pe was pre-cast to x.dtype).
    y = x_ref[...] + pe_ref[...]                         # (TB, TN) + (1, TN)

    if training and p > 0.0:
        j = pl.program_id(0)                             # column (S*D) tile index
        i = pl.program_id(1)                             # row (batch) tile index
        rows = jax.lax.broadcasted_iota(jnp.int32, (tb, tn), 0) + i * tb
        cols = jax.lax.broadcasted_iota(jnp.int32, (tb, tn), 1) + j * tn
        idx = (rows * sd + cols).astype(jnp.uint32)      # global element counter
        seed = seed_ref[0].astype(jnp.uint32)
        # murmur3-style finalizer -> uniform 32-bit hash per element (VPU int ops only).
        h = idx * jnp.uint32(0x9E3779B9) + seed
        h = h ^ (h >> jnp.uint32(16))
        h = h * jnp.uint32(0x85EBCA6B)
        h = h ^ (h >> jnp.uint32(13))
        h = h * jnp.uint32(0xC2B2AE35)
        h = h ^ (h >> jnp.uint32(16))
        # Integer-threshold compare + single fused select: keep prob = 1 - p.
        keep = h >= jnp.uint32(thresh)
        y = jnp.where(keep, y * jnp.asarray(inv_keep, dtype=y.dtype), jnp.zeros_like(y))

    o_ref[...] = y


def positional_encoding_forward(x, pe, *, p: float, training: bool = False, seed: int = 0):
    """x: (B, S, D); pe: (max_len, D).  Returns dropout(x + pe[:S]) in x.dtype."""
    B, S, D = x.shape
    dtype = x.dtype
    SD = S * D

    # Glue: static slice, pre-cast pe to the compute/output dtype, lane-dense reshape.
    pe_slice = pe[:S, :].astype(dtype).reshape(1, SD)
    x2 = x.reshape(B, SD)

    # Lane tile: large multiple of 128 (unmasked vst), else take the full dim.
    if SD % _LANE == 0:
        TN = min(SD, 4096)
    else:
        TN = SD
    # Row (batch) tile: multiple of 8 or the full batch; cap per-buffer tile ~2 MiB
    # so double-buffered x + out fit comfortably even in v7x's 64 MiB VMEM.
    itemsize = x.dtype.itemsize
    if B % _SUBLANE == 0:
        max_rows = max(_SUBLANE, (2 * 1024 * 1024) // (TN * itemsize))
        TB = min(B, (max_rows // _SUBLANE) * _SUBLANE)
    else:
        TB = B

    n_col_tiles = pl.cdiv(SD, TN)
    n_row_tiles = pl.cdiv(B, TB)

    thresh = min(int(p * 4294967296.0), 4294967295) if (training and p > 0.0) else 0
    inv_keep = 1.0 / (1.0 - p) if p < 1.0 else 0.0

    kernel = functools.partial(
        _pe_kernel, p=float(p), training=bool(training),
        sd=SD, tb=TB, tn=TN, thresh=thresh, inv_keep=inv_keep)

    seed_arr = jnp.array([seed], dtype=jnp.int32)

    out2 = pl.pallas_call(
        kernel,
        out_shape=jax.ShapeDtypeStruct((B, SD), dtype),
        # Inner (fastest) grid axis is the batch-tile axis, so pe's block index is
        # unchanged along it and Pallas keeps pe resident (no re-DMA per step).
        grid=(n_col_tiles, n_row_tiles),
        in_specs=[
            pl.BlockSpec(memory_space=pltpu.MemorySpace.SMEM),        # seed scalar
            pl.BlockSpec((TB, TN), lambda j, i: (i, j)),              # x tile
            pl.BlockSpec((1, TN), lambda j, i: (0, j)),               # pe tile (resident)
        ],
        out_specs=pl.BlockSpec((TB, TN), lambda j, i: (i, j)),
        compiler_params=pltpu.CompilerParams(
            dimension_semantics=("parallel", "parallel"),             # shards across TCs on v7x
            vmem_limit_bytes=48 * 1024 * 1024,
        ),
    )(seed_arr, x2, pe_slice)

    return out2.reshape(B, S, D)


if __name__ == "__main__":
    B, S, D = 2, 8, 32
    max_len = 64
    dropout_p = 0.1

    key = jax.random.PRNGKey(0)
    x = jax.random.normal(key, (B, S, D), dtype=jnp.float32)
    pe = _make_pe(max_len, D)

    # Eval mode (dropout is identity) — must match the pure-JAX reference.
    out_eval = positional_encoding_forward(x, pe, p=dropout_p, training=False)
    out_eval = jax.block_until_ready(out_eval)
    ref = x + pe[None, :S, :]
    assert out_eval.shape == (B, S, D)
    assert jnp.allclose(out_eval, ref, atol=1e-6, rtol=1e-6), "mismatch vs reference"

    # Training mode: every output element must be either 0 (dropped) or ref/(1-p) (kept).
    out_train = positional_encoding_forward(x, pe, p=dropout_p, training=True, seed=1234)
    out_train = jax.block_until_ready(out_train)
    assert out_train.shape == (B, S, D)
    scaled = ref / (1.0 - dropout_p)
    ok = jnp.isclose(out_train, scaled, atol=1e-5, rtol=1e-5) | (out_train == 0.0)
    assert bool(jnp.all(ok)), "training output is not a valid inverted-dropout of x+pe"

    print("KERNEL_OK")
</pallas_src>

<mosaic_0001>
module attributes {stable_mosaic.version = 11 : i64} {
  func.func @_pe_kernel(%arg0: i32, %arg1: i32, %arg2: memref<1xi32, #tpu.memory_space<smem>>, %arg3: memref<2x256xf32, #tpu.memory_space<vmem>>, %arg4: memref<1x256xf32, #tpu.memory_space<vmem>>, %arg5: memref<2x256xf32, #tpu.memory_space<vmem>>) attributes {dimension_semantics = [#tpu.dimension_semantics<parallel>, #tpu.dimension_semantics<parallel>], iteration_bounds = array<i64: 1, 1>, scalar_prefetch = 0 : i64, scratch_operands = 0 : i64, tpu.core_type = #tpu.core_type<tc>, window_params = [{transform_indices = @transform_0, window_bounds = array<i64: 1>}, {transform_indices = @transform_1, window_bounds = array<i64: 2, 256>}, {transform_indices = @transform_2, window_bounds = array<i64: 1, 256>}, {transform_indices = @transform_3, window_bounds = array<i64: 2, 256>}]} {
    %c0 = arith.constant 0 : index
    %c0_0 = arith.constant 0 : index
    %0 = vector.load %arg3[%c0, %c0_0] : memref<2x256xf32, #tpu.memory_space<vmem>>, vector<2x256xf32>
    %c0_1 = arith.constant 0 : index
    %c0_2 = arith.constant 0 : index
    %1 = vector.load %arg4[%c0_1, %c0_2] : memref<1x256xf32, #tpu.memory_space<vmem>>, vector<1x256xf32>
    %2 = vector.broadcast %1 : vector<1x256xf32> to vector<2x256xf32>
    %3 = arith.addf %0, %2 : vector<2x256xf32>
    %c0_3 = arith.constant 0 : index
    %c0_4 = arith.constant 0 : index
    %4 = vector.load %arg5[%c0_3, %c0_4] : memref<2x256xf32, #tpu.memory_space<vmem>>, vector<2x256xf32>
    tpu.vector_store %arg5[%c0_3, %c0_4], %3 {strides = array<i32>} : memref<2x256xf32, #tpu.memory_space<vmem>>, vector<2x256xf32>,
    return
  }
  func.func @transform_0(%arg0: i32, %arg1: i32) -> i32 {
    %c0_i32 = arith.constant 0 : i32
    %c0_i32_0 = arith.constant 0 : i32
    return %c0_i32 : i32
  }
  func.func @transform_1(%arg0: i32, %arg1: i32) -> (i32, i32) {
    %c0_i32 = arith.constant 0 : i32
    return %arg1, %arg0 : i32, i32
  }
  func.func @transform_2(%arg0: i32, %arg1: i32) -> (i32, i32) {
    %c0_i32 = arith.constant 0 : i32
    %c0_i32_0 = arith.constant 0 : i32
    return %c0_i32, %arg0 : i32, i32
  }
  func.func @transform_3(%arg0: i32, %arg1: i32) -> (i32, i32) {
    %c0_i32 = arith.constant 0 : i32
    return %arg1, %arg0 : i32, i32
  }
}

</mosaic_0001>

<llo_original>
// kernel: tpu_custom_call.1
$region0: #{tpu_custom_call.1}
  #allocation0 [shape = 'u32[]', space=smem, size = 0x4, offset = 0x4, fixed_abs, tag = 'smem constant byte address 0x4 - core index']
  #allocation1 [shape = 'u32[72,128]{1,0:T(1,128)}', space=vmem, size = 0x9000, scoped, tag = 'internal scratch']
  #allocation2 [shape = 's32[1]{0:T(128)S(6)}', space=smem, size = 0x200, scoped, tag = 'scoped memory for tpu_custom_call.1']
  %s0 = inlined_call_operand.<no memory space> [shape: s32[1], index: 0, kind: input, shape index: {}]
  %s1 = inlined_call_operand.hbm [shape: f32[2,256], index: 1, kind: input, shape index: {}]
  %s2 = inlined_call_operand.vmem [shape: f32[1,256], index: 2, kind: input, shape index: {}]
  %s3 = inlined_call_operand.hbm [shape: f32[2,256], index: 3, kind: output, shape index: {}]
  %s4 = sld [smem:[#allocation0]]
  $region26: #{tpu_custom_call.1} parent=0
    _
  %s6 = ssub.s32 1, %s4
  %s7 = scalar_select 0, %s6, %s4
  %8 = sst [smem:[#allocation2]] %s0
  $region1: #{tpu_custom_call.1} parent=0
    #allocation3 [shape = 'u8[2048]{0}', space=vmem, size = 0x800, scoped, tag = 'input window, operand 1, single buffered']
    #allocation4 [shape = 's32[1]{0}', space=sflag, size = 0x4, scoped, tag = 'scoped memory for tpu_custom_call.1']
    #allocation5 [shape = 's32[1]{0}', space=sflag, size = 0x4, scoped, tag = 'scoped memory for tpu_custom_call.1']
    #allocation6 [shape = 'u8[2048]{0}', space=vmem, size = 0x800, scoped, tag = 'output window, operand 0, single buffered']
    %9 = vsyncpa [#allocation4], 0
    %10 = vsyncpa [#allocation5], 0
    // Predicated region
    $region2: #{tpu_custom_call.1} parent=1 // pred_check
      _
    $region3: #{tpu_custom_call.1} parent=1 // pred_check_branch
      %12 = sbr.rel (0) target = $region5
    $region4: #{tpu_custom_call.1} parent=1 // pred_region
      _
    $region5: #{tpu_custom_call.1} parent=1 // pred_fallthru
      _
    // Predicated region
    $region6: #{tpu_custom_call.1} parent=1 // pred_check
      _
    $region7: #{tpu_custom_call.1} parent=1 // pred_check_branch
      %14 = sbr.rel (0) target = $region9
    $region8: #{tpu_custom_call.1} parent=1 // pred_region
      %16 = vsyncadd [#allocation4], 0
      %s18 = sshll.u32 %s1, 4
      %s19 = int_to_ptr.hbm [resolvable:$true] %s18
      %s20 = sshll.u32 [#allocation3], 4
      %s21 = int_to_ptr.vmem [resolvable:$true] %s20
      %23 = dma.hbm_to_vmem [thread:$0]  %s19, 64, %s21, [#allocation4]
    $region9: #{tpu_custom_call.1} parent=1 // pred_fallthru
      _
    // Predicated region
    $region10: #{tpu_custom_call.1} parent=1 // pred_check
      _
    $region11: #{tpu_custom_call.1} parent=1 // pred_check_branch
      %25 = sbr.rel (0) target = $region13
    $region12: #{tpu_custom_call.1} parent=1 // pred_region
      _
    $region13: #{tpu_custom_call.1} parent=1 // pred_fallthru
      _
    // Predicated region
    $region14: #{tpu_custom_call.1} parent=1 // pred_check
      _
    $region15: #{tpu_custom_call.1} parent=1 // pred_check_branch
      %27 = sbr.rel (0) target = $region17
    $region16: #{tpu_custom_call.1} parent=1 // pred_region
      %29 = dma.done [#allocation4], 64
    $region17: #{tpu_custom_call.1} parent=1 // pred_fallthru
      _
    %v30 = vld [vmem:[#allocation3] sm:$0xf]
    %v31 = vld [vmem:[%s2] sm:$0x3]
    %v33 = vperm.slane %v31, 0
    %v34 = vperm.slane %v31, 1
    %v35 = vrot.slane %v34, 6
    %vm36 = vcmask 1041408
    %v37 = vsel %vm36, %v33, %v35
    %v39 = vadd.f32 %v30, %v37
    %40 = vst [vmem:[#allocation6] sm:$0xf] %v39
    // Predicated region
    $region18: #{tpu_custom_call.1} parent=1 // pred_check
      _
    $region19: #{tpu_custom_call.1} parent=1 // pred_check_branch
      %42 = sbr.rel (0) target = $region21
    $region20: #{tpu_custom_call.1} parent=1 // pred_region
      %44 = vsyncadd [#allocation5], 0
      %s46 = sshll.u32 [#allocation6], 4
      %s47 = int_to_ptr.vmem [resolvable:$true] %s46
      %s48 = sshll.u32 %s3, 4
      %s49 = int_to_ptr.hbm [resolvable:$true] %s48
      %51 = dma.vmem_to_hbm [thread:$0]  %s47, 64, %s49, [#allocation5]
    $region21: #{tpu_custom_call.1} parent=1 // pred_fallthru
      _
    // Predicated region
    $region22: #{tpu_custom_call.1} parent=1 // pred_check
      _
    $region23: #{tpu_custom_call.1} parent=1 // pred_check_branch
      %53 = sbr.rel (0) target = $region25
    $region24: #{tpu_custom_call.1} parent=1 // pred_region
      %55 = dma.done [#allocation5], 64
    $region25: #{tpu_custom_call.1} parent=1 // pred_fallthru
      _
    %56 = vsyncpa [#allocation4], 1
    %57 = vsyncpa [#allocation5], 1

</llo_original>
